<compile_context>
chip_gen: v6e
topology: v6e:2x2x1
jax: 0.10.0
libtpu: 0.0.40
codegen_flags: <defaults>
</compile_context>

<pallas_src>
import jax
import jax.numpy as jnp
from jax.experimental import pallas as pl
from jax.experimental.pallas import tpu as pltpu

# ---- small, deterministic problem sizes -------------------------------------
B, C, H, W = 2, 4, 16, 16          # full input images (NCHW)
NCROPS, HC, WC = 3, 8, 8           # crops per image (NCHW crops)
D = 32                             # hidden feature width
K = C * H * W                      # 1024
KC = C * HC * WC                   # 256

# Packed output slab layout: single lane-dense (8, 128) f32 block.
#   column 0             : logits (output before .view(-1)), rows 0..B-1
#   column 1             : weights_max (B, 1), rows 0..B-1
#   columns 2..2+NCROPS-1: weights_org (B, NCROPS), rows 0..B-1
#   [0, 2+NCROPS]        : scalar loss
OUT_ROWS, OUT_LANES = 8, 128
COL_LOGITS = 0
COL_WMAX = 1
COL_WORG = 2
COL_LOSS = 2 + NCROPS


def _full_spec(shape):
    # whole-array block, single grid step
    return pl.BlockSpec(shape, lambda i, _nd=len(shape): (0,) * _nd)


# ---------------------------------------------------------------------------
# Fused kernel: get_features + forward(crops, features) + loss
# ---------------------------------------------------------------------------
def trainer_fused_kernel(x_ref, crops_ref, w_enc_ref, b_enc_ref,
                         w_crop_ref, b_crop_ref, w_attn_ref,
                         w_cls_ref, b_cls_ref, label_ref, out_ref):
    # ---- model.get_features(input): linear encoder over the full image ------
    # NOTE: with a production-sized encoder this dot should be K-tiled
    # (reduction axis last in grid) so double-buffered blocks fit v7x's 64 MiB
    # VMEM; at these toy sizes whole-array blocks are fine.
    feats = jnp.dot(x_ref[...], w_enc_ref[...],
                    preferred_element_type=jnp.float32) + b_enc_ref[...]      # (B, D)

    # ---- model.forward(crops, features): one stacked crop matmul ------------
    cf = jnp.dot(crops_ref[...], w_crop_ref[...],
                 preferred_element_type=jnp.float32) + b_crop_ref[...]        # (NCROPS*B, D)
    al = jnp.dot(cf, w_attn_ref[...],
                 preferred_element_type=jnp.float32)                          # (NCROPS*B, 1)

    # per-crop attention-logit columns (B, 1) via static slices (no concat)
    cols = [al[n * B:(n + 1) * B, :] for n in range(NCROPS)]
    w_max = cols[0]
    for n in range(1, NCROPS):
        w_max = jnp.maximum(w_max, cols[n])                                   # (B, 1)

    # softmax over crops + attention pooling of crop features (f32 epilogue)
    exps = [jnp.exp(c - w_max) for c in cols]
    denom = exps[0]
    for n in range(1, NCROPS):
        denom = denom + exps[n]
    inv = 1.0 / denom                                                         # (B, 1)
    pooled = (exps[0] * inv) * cf[0:B, :]
    for n in range(1, NCROPS):
        pooled = pooled + (exps[n] * inv) * cf[n * B:(n + 1) * B, :]          # (B, D)

    fused = feats + pooled
    logits = jnp.dot(fused, w_cls_ref[...],
                     preferred_element_type=jnp.float32) + b_cls_ref[...]     # (B, 1)

    # ---- loss = criterion(w_max, w_org) + CE(output.view(-1), label) --------
    # TODO(synk): get_loss() is defined outside this module; MSE stands in.
    mse_acc = jnp.zeros((1, 1), jnp.float32)
    for n in range(NCROPS):
        d = w_max - cols[n]
        mse_acc = mse_acc + jnp.sum(d * d, axis=0, keepdims=True)
    mse = mse_acc * (1.0 / float(B * NCROPS))                                 # (1, 1)

    # soft-target cross-entropy on the flattened 1-D logits (float targets)
    z = logits                                                                # (B, 1)
    y = label_ref[...]                                                        # (B, 1)
    m = jnp.max(z, axis=0, keepdims=True)                                     # (1, 1)
    lse = jnp.log(jnp.sum(jnp.exp(z - m), axis=0, keepdims=True)) + m         # (1, 1)
    ce = jnp.sum(y * (lse - z), axis=0, keepdims=True)                        # (1, 1)
    loss = mse + ce                                                           # (1, 1)

    # ---- pack everything into one lane-dense (8, 128) output block ----------
    out_ref[...] = jnp.zeros((OUT_ROWS, OUT_LANES), jnp.float32)
    out_ref[0:B, COL_LOGITS:COL_LOGITS + 1] = logits
    out_ref[0:B, COL_WMAX:COL_WMAX + 1] = w_max
    for n in range(NCROPS):
        out_ref[0:B, COL_WORG + n:COL_WORG + n + 1] = cols[n]
    out_ref[0:1, COL_LOSS:COL_LOSS + 1] = loss


# ---------------------------------------------------------------------------
# Wrappers
# ---------------------------------------------------------------------------
def _trainer_fused_call(x_flat, crops_flat, label_col, params):
    w_enc, b_enc, w_crop, b_crop, w_attn, w_cls, b_cls = params
    inputs = (x_flat, crops_flat, w_enc, b_enc, w_crop, b_crop,
              w_attn, w_cls, b_cls, label_col)
    return pl.pallas_call(
        trainer_fused_kernel,
        out_shape=jax.ShapeDtypeStruct((OUT_ROWS, OUT_LANES), jnp.float32),
        grid=(1,),
        in_specs=[_full_spec(a.shape) for a in inputs],
        out_specs=_full_spec((OUT_ROWS, OUT_LANES)),
        # Single-step grid; at real model sizes split a batch/crop axis here and
        # mark it "parallel" to engage v7x's second TensorCore.
        compiler_params=pltpu.CompilerParams(dimension_semantics=("arbitrary",)),
    )(*inputs)


@jax.jit
def trainer_forward(x, crops, label, params):
    # glue only: flatten NCHW -> (rows, features); all math stays in the kernel
    x_flat = x.reshape(B, K)
    crops_flat = crops.reshape(NCROPS * B, KC)
    label_col = label.reshape(B, 1)
    slab = _trainer_fused_call(x_flat, crops_flat, label_col, params)

    loss = slab[0, COL_LOSS]
    logits = slab[0:B, COL_LOGITS:COL_LOGITS + 1]          # (B, 1)
    output = logits.reshape(-1)                            # output.view(-1)
    wmax = slab[0:B, COL_WMAX:COL_WMAX + 1]                # (B, 1)
    worg = slab[0:B, COL_WORG:COL_WORG + NCROPS]           # (B, NCROPS)
    return loss, output, wmax, worg


# ---------------------------------------------------------------------------
# Pure-JAX reference (same math) for a sanity check
# ---------------------------------------------------------------------------
def reference(x, crops, label, params):
    w_enc, b_enc, w_crop, b_crop, w_attn, w_cls, b_cls = params
    x_flat = x.reshape(B, K)
    crops_flat = crops.reshape(NCROPS, B, KC)
    feats = x_flat @ w_enc + b_enc
    cfs = [crops_flat[n] @ w_crop + b_crop for n in range(NCROPS)]
    cols = [cf @ w_attn for cf in cfs]
    w_org = jnp.concatenate(cols, axis=-1)
    w_max = jnp.max(w_org, axis=-1, keepdims=True)
    e = jnp.exp(w_org - w_max)
    attn = e / jnp.sum(e, axis=-1, keepdims=True)
    pooled = sum(attn[:, n:n + 1] * cfs[n] for n in range(NCROPS))
    out = ((feats + pooled) @ w_cls + b_cls).reshape(-1)
    wmax_b = jnp.broadcast_to(w_max, (B, NCROPS))
    m = jnp.max(out)
    lse = jnp.log(jnp.sum(jnp.exp(out - m))) + m
    ce = jnp.sum(label * (lse - out))
    mse = jnp.mean((wmax_b - w_org) ** 2)
    return mse + ce, out


if __name__ == "__main__":
    key = jax.random.PRNGKey(0)
    kx, kc, k1, k2, k3, k4, k5 = jax.random.split(key, 7)

    # inputs (PyTorch-style NCHW), deterministic
    x = jax.random.normal(kx, (B, C, H, W), dtype=jnp.float32)
    crops = jax.random.normal(kc, (NCROPS, B, C, HC, WC), dtype=jnp.float32)
    label = jnp.array([0.75, 0.25], dtype=jnp.float32)   # float targets, length B

    # deterministic synthetic parameters
    params = (
        0.02 * jax.random.normal(k1, (K, D), dtype=jnp.float32),   # w_enc
        jnp.zeros((1, D), dtype=jnp.float32),                      # b_enc
        0.02 * jax.random.normal(k2, (KC, D), dtype=jnp.float32),  # w_crop
        jnp.zeros((1, D), dtype=jnp.float32),                      # b_crop
        0.05 * jax.random.normal(k3, (D, 1), dtype=jnp.float32),   # w_attn
        0.05 * jax.random.normal(k4, (D, 1), dtype=jnp.float32),   # w_cls
        0.01 * jax.random.normal(k5, (1, 1), dtype=jnp.float32),   # b_cls
    )

    loss, output, wmax, worg = trainer_forward(x, crops, label, params)
    jax.block_until_ready((loss, output, wmax, worg))

    ref_loss, ref_out = reference(x, crops, label, params)
    assert jnp.allclose(loss, ref_loss, rtol=1e-3, atol=1e-3), (loss, ref_loss)
    assert jnp.allclose(output, ref_out, rtol=1e-3, atol=1e-3), (output, ref_out)

    print("KERNEL_OK")
</pallas_src>

<mosaic_0001>
module attributes {stable_mosaic.version = 11 : i64} {
  func.func @trainer_fused_kernel(%arg0: i32, %arg1: memref<2x1024xf32, #tpu.memory_space<vmem>>, %arg2: memref<6x256xf32, #tpu.memory_space<vmem>>, %arg3: memref<1024x32xf32, #tpu.memory_space<vmem>>, %arg4: memref<1x32xf32, #tpu.memory_space<vmem>>, %arg5: memref<256x32xf32, #tpu.memory_space<vmem>>, %arg6: memref<1x32xf32, #tpu.memory_space<vmem>>, %arg7: memref<32x1xf32, #tpu.memory_space<vmem>>, %arg8: memref<32x1xf32, #tpu.memory_space<vmem>>, %arg9: memref<1x1xf32, #tpu.memory_space<vmem>>, %arg10: memref<2x1xf32, #tpu.memory_space<vmem>>, %arg11: memref<8x128xf32, #tpu.memory_space<vmem>>) attributes {dimension_semantics = [#tpu.dimension_semantics<arbitrary>], iteration_bounds = array<i64: 1>, scalar_prefetch = 0 : i64, scratch_operands = 0 : i64, tpu.core_type = #tpu.core_type<tc>, window_params = [{pipeline_mode = #tpu.pipeline_mode<synchronous>, transform_indices = @transform_0, window_bounds = array<i64: 2, 1024>}, {pipeline_mode = #tpu.pipeline_mode<synchronous>, transform_indices = @transform_1, window_bounds = array<i64: 6, 256>}, {pipeline_mode = #tpu.pipeline_mode<synchronous>, transform_indices = @transform_2, window_bounds = array<i64: 1024, 32>}, {pipeline_mode = #tpu.pipeline_mode<synchronous>, transform_indices = @transform_3, window_bounds = array<i64: 1, 32>}, {pipeline_mode = #tpu.pipeline_mode<synchronous>, transform_indices = @transform_4, window_bounds = array<i64: 256, 32>}, {pipeline_mode = #tpu.pipeline_mode<synchronous>, transform_indices = @transform_5, window_bounds = array<i64: 1, 32>}, {pipeline_mode = #tpu.pipeline_mode<synchronous>, transform_indices = @transform_6, window_bounds = array<i64: 32, 1>}, {pipeline_mode = #tpu.pipeline_mode<synchronous>, transform_indices = @transform_7, window_bounds = array<i64: 32, 1>}, {pipeline_mode = #tpu.pipeline_mode<synchronous>, transform_indices = @transform_8, window_bounds = array<i64: 1, 1>}, {pipeline_mode = #tpu.pipeline_mode<synchronous>, transform_indices = @transform_9, window_bounds = array<i64: 2, 1>}, {pipeline_mode = #tpu.pipeline_mode<synchronous>, transform_indices = @transform_10, window_bounds = array<i64: 8, 128>}]} {
    %c0 = arith.constant 0 : index
    %c0_0 = arith.constant 0 : index
    %0 = vector.load %arg1[%c0, %c0_0] : memref<2x1024xf32, #tpu.memory_space<vmem>>, vector<2x1024xf32>
    %c0_1 = arith.constant 0 : index
    %c0_2 = arith.constant 0 : index
    %1 = vector.load %arg3[%c0_1, %c0_2] : memref<1024x32xf32, #tpu.memory_space<vmem>>, vector<1024x32xf32>
    %cst = arith.constant dense<0.000000e+00> : vector<2x32xf32>
    %2 = tpu.matmul %0, %1, %cst {dimension_numbers = #tpu.dot_dimension_numbers<[1], [0], [0], [1], [0, 0, 1, 1], [], []>} : vector<2x1024xf32>, vector<1024x32xf32>, vector<2x32xf32> -> vector<2x32xf32>
    %c0_3 = arith.constant 0 : index
    %c0_4 = arith.constant 0 : index
    %3 = vector.load %arg4[%c0_3, %c0_4] : memref<1x32xf32, #tpu.memory_space<vmem>>, vector<1x32xf32>
    %4 = vector.broadcast %3 : vector<1x32xf32> to vector<2x32xf32>
    %5 = arith.addf %2, %4 : vector<2x32xf32>
    %c0_5 = arith.constant 0 : index
    %c0_6 = arith.constant 0 : index
    %6 = vector.load %arg2[%c0_5, %c0_6] : memref<6x256xf32, #tpu.memory_space<vmem>>, vector<6x256xf32>
    %c0_7 = arith.constant 0 : index
    %c0_8 = arith.constant 0 : index
    %7 = vector.load %arg5[%c0_7, %c0_8] : memref<256x32xf32, #tpu.memory_space<vmem>>, vector<256x32xf32>
    %cst_9 = arith.constant dense<0.000000e+00> : vector<6x32xf32>
    %8 = tpu.matmul %6, %7, %cst_9 {dimension_numbers = #tpu.dot_dimension_numbers<[1], [0], [0], [1], [0, 0, 1, 1], [], []>} : vector<6x256xf32>, vector<256x32xf32>, vector<6x32xf32> -> vector<6x32xf32>
    %c0_10 = arith.constant 0 : index
    %c0_11 = arith.constant 0 : index
    %9 = vector.load %arg6[%c0_10, %c0_11] : memref<1x32xf32, #tpu.memory_space<vmem>>, vector<1x32xf32>
    %10 = vector.broadcast %9 : vector<1x32xf32> to vector<6x32xf32>
    %11 = arith.addf %8, %10 : vector<6x32xf32>
    %c0_12 = arith.constant 0 : index
    %c0_13 = arith.constant 0 : index
    %12 = vector.load %arg7[%c0_12, %c0_13] : memref<32x1xf32, #tpu.memory_space<vmem>>, vector<32x1xf32>
    %cst_14 = arith.constant dense<0.000000e+00> : vector<6x1xf32>
    %13 = tpu.matmul %11, %12, %cst_14 {dimension_numbers = #tpu.dot_dimension_numbers<[1], [0], [0], [1], [0, 0, 1, 1], [], []>} : vector<6x32xf32>, vector<32x1xf32>, vector<6x1xf32> -> vector<6x1xf32>
    %14 = vector.extract_strided_slice %13 {offsets = [0, 0], sizes = [2, 1], strides = [1, 1]} : vector<6x1xf32> to vector<2x1xf32>
    %15 = vector.extract_strided_slice %13 {offsets = [2, 0], sizes = [2, 1], strides = [1, 1]} : vector<6x1xf32> to vector<2x1xf32>
    %16 = vector.extract_strided_slice %13 {offsets = [4, 0], sizes = [2, 1], strides = [1, 1]} : vector<6x1xf32> to vector<2x1xf32>
    %17 = arith.maximumf %14, %15 : vector<2x1xf32>
    %18 = arith.maximumf %17, %16 : vector<2x1xf32>
    %19 = arith.subf %14, %18 : vector<2x1xf32>
    %20 = math.exp %19 : vector<2x1xf32>
    %21 = arith.subf %15, %18 : vector<2x1xf32>
    %22 = math.exp %21 : vector<2x1xf32>
    %23 = arith.subf %16, %18 : vector<2x1xf32>
    %24 = math.exp %23 : vector<2x1xf32>
    %25 = arith.addf %20, %22 : vector<2x1xf32>
    %26 = arith.addf %25, %24 : vector<2x1xf32>
    %cst_15 = arith.constant 1.000000e+00 : f32
    %27 = vector.broadcast %cst_15 : f32 to vector<2x1xf32>
    %28 = arith.divf %27, %26 : vector<2x1xf32>
    %29 = arith.mulf %20, %28 : vector<2x1xf32>
    %30 = vector.extract_strided_slice %11 {offsets = [0, 0], sizes = [2, 32], strides = [1, 1]} : vector<6x32xf32> to vector<2x32xf32>
    %31 = vector.broadcast %29 : vector<2x1xf32> to vector<2x32xf32>
    %32 = arith.mulf %31, %30 : vector<2x32xf32>
    %33 = arith.mulf %22, %28 : vector<2x1xf32>
    %34 = vector.extract_strided_slice %11 {offsets = [2, 0], sizes = [2, 32], strides = [1, 1]} : vector<6x32xf32> to vector<2x32xf32>
    %35 = vector.broadcast %33 : vector<2x1xf32> to vector<2x32xf32>
    %36 = arith.mulf %35, %34 : vector<2x32xf32>
    %37 = arith.addf %32, %36 : vector<2x32xf32>
    %38 = arith.mulf %24, %28 : vector<2x1xf32>
    %39 = vector.extract_strided_slice %11 {offsets = [4, 0], sizes = [2, 32], strides = [1, 1]} : vector<6x32xf32> to vector<2x32xf32>
    %40 = vector.broadcast %38 : vector<2x1xf32> to vector<2x32xf32>
    %41 = arith.mulf %40, %39 : vector<2x32xf32>
    %42 = arith.addf %37, %41 : vector<2x32xf32>
    %43 = arith.addf %5, %42 : vector<2x32xf32>
    %c0_16 = arith.constant 0 : index
    %c0_17 = arith.constant 0 : index
    %44 = vector.load %arg8[%c0_16, %c0_17] : memref<32x1xf32, #tpu.memory_space<vmem>>, vector<32x1xf32>
    %cst_18 = arith.constant dense<0.000000e+00> : vector<2x1xf32>
    %45 = tpu.matmul %43, %44, %cst_18 {dimension_numbers = #tpu.dot_dimension_numbers<[1], [0], [0], [1], [0, 0, 1, 1], [], []>} : vector<2x32xf32>, vector<32x1xf32>, vector<2x1xf32> -> vector<2x1xf32>
    %c0_19 = arith.constant 0 : index
    %c0_20 = arith.constant 0 : index
    %46 = vector.load %arg9[%c0_19, %c0_20] : memref<1x1xf32, #tpu.memory_space<vmem>>, vector<1x1xf32>
    %47 = vector.broadcast %46 : vector<1x1xf32> to vector<2x1xf32>
    %48 = arith.addf %45, %47 : vector<2x1xf32>
    %cst_21 = arith.constant 0.000000e+00 : f32
    %49 = vector.broadcast %cst_21 : f32 to vector<1x1xf32>
    %50 = arith.subf %18, %14 : vector<2x1xf32>
    %51 = arith.mulf %50, %50 : vector<2x1xf32>
    %cst_22 = arith.constant dense<0.000000e+00> : vector<1xf32>
    %52 = vector.multi_reduction <add>, %51, %cst_22 [0] : vector<2x1xf32> to vector<1xf32>
    %53 = vector.shape_cast %52 : vector<1xf32> to vector<1x1xf32>
    %54 = arith.addf %49, %53 : vector<1x1xf32>
    %55 = arith.subf %18, %15 : vector<2x1xf32>
    %56 = arith.mulf %55, %55 : vector<2x1xf32>
    %cst_23 = arith.constant dense<0.000000e+00> : vector<1xf32>
    %57 = vector.multi_reduction <add>, %56, %cst_23 [0] : vector<2x1xf32> to vector<1xf32>
    %58 = vector.shape_cast %57 : vector<1xf32> to vector<1x1xf32>
    %59 = arith.addf %54, %58 : vector<1x1xf32>
    %60 = arith.subf %18, %16 : vector<2x1xf32>
    %61 = arith.mulf %60, %60 : vector<2x1xf32>
    %cst_24 = arith.constant dense<0.000000e+00> : vector<1xf32>
    %62 = vector.multi_reduction <add>, %61, %cst_24 [0] : vector<2x1xf32> to vector<1xf32>
    %63 = vector.shape_cast %62 : vector<1xf32> to vector<1x1xf32>
    %64 = arith.addf %59, %63 : vector<1x1xf32>
    %cst_25 = arith.constant 0.166666672 : f32
    %65 = vector.broadcast %cst_25 : f32 to vector<1x1xf32>
    %66 = arith.mulf %64, %65 : vector<1x1xf32>
    %c0_26 = arith.constant 0 : index
    %c0_27 = arith.constant 0 : index
    %67 = vector.load %arg10[%c0_26, %c0_27] : memref<2x1xf32, #tpu.memory_space<vmem>>, vector<2x1xf32>
    %cst_28 = arith.constant dense<0xFF800000> : vector<1xf32>
    %68 = vector.multi_reduction <maximumf>, %48, %cst_28 [0] : vector<2x1xf32> to vector<1xf32>
    %69 = vector.shape_cast %68 : vector<1xf32> to vector<1x1xf32>
    %70 = vector.broadcast %69 : vector<1x1xf32> to vector<2x1xf32>
    %71 = arith.subf %48, %70 : vector<2x1xf32>
    %72 = math.exp %71 : vector<2x1xf32>
    %cst_29 = arith.constant dense<0.000000e+00> : vector<1xf32>
    %73 = vector.multi_reduction <add>, %72, %cst_29 [0] : vector<2x1xf32> to vector<1xf32>
    %74 = vector.shape_cast %73 : vector<1xf32> to vector<1x1xf32>
    %75 = math.log %74 : vector<1x1xf32>
    %76 = arith.addf %75, %69 : vector<1x1xf32>
    %77 = vector.broadcast %76 : vector<1x1xf32> to vector<2x1xf32>
    %78 = arith.subf %77, %48 : vector<2x1xf32>
    %79 = arith.mulf %67, %78 : vector<2x1xf32>
    %cst_30 = arith.constant dense<0.000000e+00> : vector<1xf32>
    %80 = vector.multi_reduction <add>, %79, %cst_30 [0] : vector<2x1xf32> to vector<1xf32>
    %81 = vector.shape_cast %80 : vector<1xf32> to vector<1x1xf32>
    %82 = arith.addf %66, %81 : vector<1x1xf32>
    %cst_31 = arith.constant 0.000000e+00 : f32
    %83 = vector.broadcast %cst_31 : f32 to vector<8x128xf32>
    %c0_32 = arith.constant 0 : index
    %c0_33 = arith.constant 0 : index
    %84 = vector.load %arg11[%c0_32, %c0_33] : memref<8x128xf32, #tpu.memory_space<vmem>>, vector<8x128xf32>
    tpu.vector_store %arg11[%c0_32, %c0_33], %83 {strides = array<i32>} : memref<8x128xf32, #tpu.memory_space<vmem>>, vector<8x128xf32>,
    %c0_34 = arith.constant 0 : index
    %c0_35 = arith.constant 0 : index
    %85 = vector.load %arg11[%c0_34, %c0_35] : memref<8x128xf32, #tpu.memory_space<vmem>>, vector<2x1xf32>
    tpu.vector_store %arg11[%c0_34, %c0_35], %48 {strides = array<i32>} : memref<8x128xf32, #tpu.memory_space<vmem>>, vector<2x1xf32>,
    %c0_36 = arith.constant 0 : index
    %c1 = arith.constant 1 : index
    %86 = vector.load %arg11[%c0_36, %c1] : memref<8x128xf32, #tpu.memory_space<vmem>>, vector<2x1xf32>
    tpu.vector_store %arg11[%c0_36, %c1], %18 {strides = array<i32>} : memref<8x128xf32, #tpu.memory_space<vmem>>, vector<2x1xf32>,
    %c0_37 = arith.constant 0 : index
    %c2 = arith.constant 2 : index
    %87 = vector.load %arg11[%c0_37, %c2] : memref<8x128xf32, #tpu.memory_space<vmem>>, vector<2x1xf32>
    tpu.vector_store %arg11[%c0_37, %c2], %14 {strides = array<i32>} : memref<8x128xf32, #tpu.memory_space<vmem>>, vector<2x1xf32>,
    %c0_38 = arith.constant 0 : index
    %c3 = arith.constant 3 : index
    %88 = vector.load %arg11[%c0_38, %c3] : memref<8x128xf32, #tpu.memory_space<vmem>>, vector<2x1xf32>
    tpu.vector_store %arg11[%c0_38, %c3], %15 {strides = array<i32>} : memref<8x128xf32, #tpu.memory_space<vmem>>, vector<2x1xf32>,
    %c0_39 = arith.constant 0 : index
    %c4 = arith.constant 4 : index
    %89 = vector.load %arg11[%c0_39, %c4] : memref<8x128xf32, #tpu.memory_space<vmem>>, vector<2x1xf32>
    tpu.vector_store %arg11[%c0_39, %c4], %16 {strides = array<i32>} : memref<8x128xf32, #tpu.memory_space<vmem>>, vector<2x1xf32>,
    %c0_40 = arith.constant 0 : index
    %c5 = arith.constant 5 : index
    %90 = vector.load %arg11[%c0_40, %c5] : memref<8x128xf32, #tpu.memory_space<vmem>>, vector<1x1xf32>
    tpu.vector_store %arg11[%c0_40, %c5], %82 {strides = array<i32>} : memref<8x128xf32, #tpu.memory_space<vmem>>, vector<1x1xf32>,
    return
  }
  func.func @transform_0(%arg0: i32) -> (i32, i32) {
    %c0_i32 = arith.constant 0 : i32
    %c0_i32_0 = arith.constant 0 : i32
    %c0_i32_1 = arith.constant 0 : i32
    return %c0_i32, %c0_i32_0 : i32, i32
  }
  func.func @transform_1(%arg0: i32) -> (i32, i32) {
    %c0_i32 = arith.constant 0 : i32
    %c0_i32_0 = arith.constant 0 : i32
    %c0_i32_1 = arith.constant 0 : i32
    return %c0_i32, %c0_i32_0 : i32, i32
  }
  func.func @transform_2(%arg0: i32) -> (i32, i32) {
    %c0_i32 = arith.constant 0 : i32
    %c0_i32_0 = arith.constant 0 : i32
    %c0_i32_1 = arith.constant 0 : i32
    return %c0_i32, %c0_i32_0 : i32, i32
  }
  func.func @transform_3(%arg0: i32) -> (i32, i32) {
    %c0_i32 = arith.constant 0 : i32
    %c0_i32_0 = arith.constant 0 : i32
    %c0_i32_1 = arith.constant 0 : i32
    return %c0_i32, %c0_i32_0 : i32, i32
  }
  func.func @transform_4(%arg0: i32) -> (i32, i32) {
    %c0_i32 = arith.constant 0 : i32
    %c0_i32_0 = arith.constant 0 : i32
    %c0_i32_1 = arith.constant 0 : i32
    return %c0_i32, %c0_i32_0 : i32, i32
  }
  func.func @transform_5(%arg0: i32) -> (i32, i32) {
    %c0_i32 = arith.constant 0 : i32
    %c0_i32_0 = arith.constant 0 : i32
    %c0_i32_1 = arith.constant 0 : i32
    return %c0_i32, %c0_i32_0 : i32, i32
  }
  func.func @transform_6(%arg0: i32) -> (i32, i32) {
    %c0_i32 = arith.constant 0 : i32
    %c0_i32_0 = arith.constant 0 : i32
    %c0_i32_1 = arith.constant 0 : i32
    return %c0_i32, %c0_i32_0 : i32, i32
  }
  func.func @transform_7(%arg0: i32) -> (i32, i32) {
    %c0_i32 = arith.constant 0 : i32
    %c0_i32_0 = arith.constant 0 : i32
    %c0_i32_1 = arith.constant 0 : i32
    return %c0_i32, %c0_i32_0 : i32, i32
  }
  func.func @transform_8(%arg0: i32) -> (i32, i32) {
    %c0_i32 = arith.constant 0 : i32
    %c0_i32_0 = arith.constant 0 : i32
    %c0_i32_1 = arith.constant 0 : i32
    return %c0_i32, %c0_i32_0 : i32, i32
  }
  func.func @transform_9(%arg0: i32) -> (i32, i32) {
    %c0_i32 = arith.constant 0 : i32
    %c0_i32_0 = arith.constant 0 : i32
    %c0_i32_1 = arith.constant 0 : i32
    return %c0_i32, %c0_i32_0 : i32, i32
  }
  func.func @transform_10(%arg0: i32) -> (i32, i32) {
    %c0_i32 = arith.constant 0 : i32
    %c0_i32_0 = arith.constant 0 : i32
    %c0_i32_1 = arith.constant 0 : i32
    return %c0_i32, %c0_i32_0 : i32, i32
  }
}

</mosaic_0001>

<llo_original>
// kernel: trainer_forward.1
$region0: #{trainer_forward.1}
  #allocation0 [shape = 'u32[]', space=smem, size = 0x4, offset = 0x4, fixed_abs, tag = 'smem constant byte address 0x4 - core index']
  #allocation1 [shape = 'u32[144,128]{1,0:T(1,128)}', space=vmem, size = 0x12000, scoped, tag = 'internal scratch']
  #allocation2 [shape = 'f32[1,1]{1,0:T(1,128)S(1)}', space=vmem, size = 0x200, scoped, tag = 'scoped memory for trainer_forward.1']
  %s0 = inlined_call_operand.vmem [shape: f32[2,1024], index: 0, kind: input, shape index: {}]
  %s1 = inlined_call_operand.vmem [shape: f32[6,256], index: 1, kind: input, shape index: {}]
  %s2 = inlined_call_operand.vmem [shape: f32[1024,32], index: 2, kind: input, shape index: {}]
  %s3 = inlined_call_operand.vmem [shape: f32[1,32], index: 3, kind: input, shape index: {}]
  %s4 = inlined_call_operand.vmem [shape: f32[256,32], index: 4, kind: input, shape index: {}]
  %s5 = inlined_call_operand.vmem [shape: f32[1,32], index: 5, kind: input, shape index: {}]
  %s6 = inlined_call_operand.vmem [shape: f32[32,1], index: 6, kind: input, shape index: {}]
  %s7 = inlined_call_operand.vmem [shape: f32[32,1], index: 7, kind: input, shape index: {}]
  %s8 = inlined_call_operand.<no memory space> [shape: f32[1,1], index: 8, kind: input, shape index: {}]
  %s9 = inlined_call_operand.vmem [shape: f32[2,1], index: 9, kind: input, shape index: {}]
  %s10 = inlined_call_operand.vmem [shape: f32[8,128], index: 10, kind: output, shape index: {}]
  %s11 = sld [smem:[#allocation0]]
  $region50: #{trainer_forward.1} parent=0
    _
  %s13 = ssub.s32 1, %s11
  %s14 = scalar_select 0, %s13, %s11
  %v15 = vstv %s8
  %16 = vst [vmem:[#allocation2] sm:$0x1] %v15
  // Predicated region
  $region2: #{trainer_forward.1} parent=0 // pred_check
    _
  $region3: #{trainer_forward.1} parent=0 // pred_check_branch
    %18 = sbr.rel (0) target = $region5
  $region4: #{trainer_forward.1} parent=0 // pred_region
    _
  $region5: #{trainer_forward.1} parent=0 // pred_fallthru
    _
  // Predicated region
  $region6: #{trainer_forward.1} parent=0 // pred_check
    _
  $region7: #{trainer_forward.1} parent=0 // pred_check_branch
    %20 = sbr.rel (0) target = $region9
  $region8: #{trainer_forward.1} parent=0 // pred_region
    _
  $region9: #{trainer_forward.1} parent=0 // pred_fallthru
    _
  // Predicated region
  $region10: #{trainer_forward.1} parent=0 // pred_check
    _
  $region11: #{trainer_forward.1} parent=0 // pred_check_branch
    %22 = sbr.rel (0) target = $region13
  $region12: #{trainer_forward.1} parent=0 // pred_region
    _
  $region13: #{trainer_forward.1} parent=0 // pred_fallthru
    _
  // Predicated region
  $region14: #{trainer_forward.1} parent=0 // pred_check
    _
  $region15: #{trainer_forward.1} parent=0 // pred_check_branch
    %24 = sbr.rel (0) target = $region17
  $region16: #{trainer_forward.1} parent=0 // pred_region
    _
  $region17: #{trainer_forward.1} parent=0 // pred_fallthru
    _
  // Predicated region
  $region18: #{trainer_forward.1} parent=0 // pred_check
    _
  $region19: #{trainer_forward.1} parent=0 // pred_check_branch
    %26 = sbr.rel (0) target = $region21
  $region20: #{trainer_forward.1} parent=0 // pred_region
    _
  $region21: #{trainer_forward.1} parent=0 // pred_fallthru
    _
  // Predicated region
  $region22: #{trainer_forward.1} parent=0 // pred_check
    _
  $region23: #{trainer_forward.1} parent=0 // pred_check_branch
    %28 = sbr.rel (0) target = $region25
  $region24: #{trainer_forward.1} parent=0 // pred_region
    _
  $region25: #{trainer_forward.1} parent=0 // pred_fallthru
    _
  // Predicated region
  $region26: #{trainer_forward.1} parent=0 // pred_check
    _
  $region27: #{trainer_forward.1} parent=0 // pred_check_branch
    %30 = sbr.rel (0) target = $region29
  $region28: #{trainer_forward.1} parent=0 // pred_region
    _
  $region29: #{trainer_forward.1} parent=0 // pred_fallthru
    _
  // Predicated region
  $region30: #{trainer_forward.1} parent=0 // pred_check
    _
  $region31: #{trainer_forward.1} parent=0 // pred_check_branch
    %32 = sbr.rel (0) target = $region33
  $region32: #{trainer_forward.1} parent=0 // pred_region
    _
  $region33: #{trainer_forward.1} parent=0 // pred_fallthru
    _
  // Predicated region
  $region34: #{trainer_forward.1} parent=0 // pred_check
    _
  $region35: #{trainer_forward.1} parent=0 // pred_check_branch
    %34 = sbr.rel (0) target = $region37
  $region36: #{trainer_forward.1} parent=0 // pred_region
    _
  $region37: #{trainer_forward.1} parent=0 // pred_fallthru
    _
  // Predicated region
  $region38: #{trainer_forward.1} parent=0 // pred_check
    _
  $region39: #{trainer_forward.1} parent=0 // pred_check_branch
    %36 = sbr.rel (0) target = $region41
  $region40: #{trainer_forward.1} parent=0 // pred_region
    _
  $region41: #{trainer_forward.1} parent=0 // pred_fallthru
    _
  %v37 = vld [vmem:[%s0] sm:$0xff]
  %v38 = vld [vmem:[%s0 + $0x8] sm:$0xff]
  %v39 = vld [vmem:[%s2] sm:$0xff]
  %v40 = vld [vmem:[%s2 + $0x8] sm:$0xff]
  %v41 = vld [vmem:[%s2 + $0x10] sm:$0xff]
  %v42 = vld [vmem:[%s2 + $0x18] sm:$0xff]
  %v43 = vld [vmem:[%s2 + $0x20] sm:$0xff]
  %v44 = vld [vmem:[%s2 + $0x28] sm:$0xff]
  %v45 = vld [vmem:[%s2 + $0x30] sm:$0xff]
  %v46 = vld [vmem:[%s2 + $0x38] sm:$0xff]
  %v47 = vld [vmem:[%s2 + $0x40] sm:$0xff]
  %v48 = vld [vmem:[%s2 + $0x48] sm:$0xff]
  %v49 = vld [vmem:[%s2 + $0x50] sm:$0xff]
  %v50 = vld [vmem:[%s2 + $0x58] sm:$0xff]
  %v51 = vld [vmem:[%s2 + $0x60] sm:$0xff]
  %v52 = vld [vmem:[%s2 + $0x68] sm:$0xff]
  %v53 = vld [vmem:[%s2 + $0x70] sm:$0xff]
  %v54 = vld [vmem:[%s2 + $0x78] sm:$0xff]
  %v55 = vld [vmem:[%s2 + $0x80] sm:$0xff]
  %v56 = vld [vmem:[%s2 + $0x88] sm:$0xff]
  %v57 = vld [vmem:[%s2 + $0x90] sm:$0xff]
  %v58 = vld [vmem:[%s2 + $0x98] sm:$0xff]
  %v59 = vld [vmem:[%s2 + $0xa0] sm:$0xff]
  %v60 = vld [vmem:[%s2 + $0xa8] sm:$0xff]
  %v61 = vld [vmem:[%s2 + $0xb0] sm:$0xff]
  %v62 = vld [vmem:[%s2 + $0xb8] sm:$0xff]
  %v63 = vld [vmem:[%s2 + $0xc0] sm:$0xff]
  %v64 = vld [vmem:[%s2 + $0xc8] sm:$0xff]
  %v65 = vld [vmem:[%s2 + $0xd0] sm:$0xff]
  %v66 = vld [vmem:[%s2 + $0xd8] sm:$0xff]
  %v67 = vld [vmem:[%s2 + $0xe0] sm:$0xff]
  %v68 = vld [vmem:[%s2 + $0xe8] sm:$0xff]
  %v69 = vld [vmem:[%s2 + $0xf0] sm:$0xff]
  %v70 = vld [vmem:[%s2 + $0xf8] sm:$0xff]
  %v71 = vld [vmem:[%s2 + $0x100] sm:$0xff]
  %v72 = vld [vmem:[%s2 + $0x108] sm:$0xff]
  %v73 = vld [vmem:[%s2 + $0x110] sm:$0xff]
  %v74 = vld [vmem:[%s2 + $0x118] sm:$0xff]
  %v75 = vld [vmem:[%s2 + $0x120] sm:$0xff]
  %v76 = vld [vmem:[%s2 + $0x128] sm:$0xff]
  %v77 = vld [vmem:[%s2 + $0x130] sm:$0xff]
  %v78 = vld [vmem:[%s2 + $0x138] sm:$0xff]
  %v79 = vld [vmem:[%s2 + $0x140] sm:$0xff]
  %v80 = vld [vmem:[%s2 + $0x148] sm:$0xff]
  %v81 = vld [vmem:[%s2 + $0x150] sm:$0xff]
  %v82 = vld [vmem:[%s2 + $0x158] sm:$0xff]
  %v83 = vld [vmem:[%s2 + $0x160] sm:$0xff]
  %v84 = vld [vmem:[%s2 + $0x168] sm:$0xff]
  %v85 = vld [vmem:[%s2 + $0x170] sm:$0xff]
  %v86 = vld [vmem:[%s2 + $0x178] sm:$0xff]
  %v87 = vld [vmem:[%s2 + $0x180] sm:$0xff]
  %v88 = vld [vmem:[%s2 + $0x188] sm:$0xff]
  %v89 = vld [vmem:[%s2 + $0x190] sm:$0xff]
  %v90 = vld [vmem:[%s2 + $0x198] sm:$0xff]
  %v91 = vld [vmem:[%s2 + $0x1a0] sm:$0xff]
  %v92 = vld [vmem:[%s2 + $0x1a8] sm:$0xff]
  %v93 = vld [vmem:[%s2 + $0x1b0] sm:$0xff]
  %v94 = vld [vmem:[%s2 + $0x1b8] sm:$0xff]
  %v95 = vld [vmem:[%s2 + $0x1c0] sm:$0xff]
  %v96 = vld [vmem:[%s2 + $0x1c8] sm:$0xff]
  %v97 = vld [vmem:[%s2 + $0x1d0] sm:$0xff]
  %v98 = vld [vmem:[%s2 + $0x1d8] sm:$0xff]
  %v99 = vld [vmem:[%s2 + $0x1e0] sm:$0xff]
  %v100 = vld [vmem:[%s2 + $0x1e8] sm:$0xff]
  %v101 = vld [vmem:[%s2 + $0x1f0] sm:$0xff]
  %v102 = vld [vmem:[%s2 + $0x1f8] sm:$0xff]
  %v103 = vld [vmem:[%s2 + $0x200] sm:$0xff]
  %v104 = vld [vmem:[%s2 + $0x208] sm:$0xff]
  %v105 = vld [vmem:[%s2 + $0x210] sm:$0xff]
  %v106 = vld [vmem:[%s2 + $0x218] sm:$0xff]
  %v107 = vld [vmem:[%s2 + $0x220] sm:$0xff]
  %v108 = vld [vmem:[%s2 + $0x228] sm:$0xff]
  %v109 = vld [vmem:[%s2 + $0x230] sm:$0xff]
  %v110 = vld [vmem:[%s2 + $0x238] sm:$0xff]
  %v111 = vld [vmem:[%s2 + $0x240] sm:$0xff]
  %v112 = vld [vmem:[%s2 + $0x248] sm:$0xff]
  %v113 = vld [vmem:[%s2 + $0x250] sm:$0xff]
  %v114 = vld [vmem:[%s2 + $0x258] sm:$0xff]
  %v115 = vld [vmem:[%s2 + $0x260] sm:$0xff]
  %v116 = vld [vmem:[%s2 + $0x268] sm:$0xff]
  %v117 = vld [vmem:[%s2 + $0x270] sm:$0xff]
  %v118 = vld [vmem:[%s2 + $0x278] sm:$0xff]
  %v119 = vld [vmem:[%s2 + $0x280] sm:$0xff]
  %v120 = vld [vmem:[%s2 + $0x288] sm:$0xff]
  %v121 = vld [vmem:[%s2 + $0x290] sm:$0xff]
  %v122 = vld [vmem:[%s2 + $0x298] sm:$0xff]
  %v123 = vld [vmem:[%s2 + $0x2a0] sm:$0xff]
  %v124 = vld [vmem:[%s2 + $0x2a8] sm:$0xff]
  %v125 = vld [vmem:[%s2 + $0x2b0] sm:$0xff]
  %v126 = vld [vmem:[%s2 + $0x2b8] sm:$0xff]
  %v127 = vld [vmem:[%s2 + $0x2c0] sm:$0xff]
  %v128 = vld [vmem:[%s2 + $0x2c8] sm:$0xff]
  %v129 = vld [vmem:[%s2 + $0x2d0] sm:$0xff]
  %v130 = vld [vmem:[%s2 + $0x2d8] sm:$0xff]
  %v131 = vld [vmem:[%s2 + $0x2e0] sm:$0xff]
  %v132 = vld [vmem:[%s2 + $0x2e8] sm:$0xff]
  %v133 = vld [vmem:[%s2 + $0x2f0] sm:$0xff]
  %v134 = vld [vmem:[%s2 + $0x2f8] sm:$0xff]
  %v135 = vld [vmem:[%s2 + $0x300] sm:$0xff]
  %v136 = vld [vmem:[%s2 + $0x308] sm:$0xff]
  %v137 = vld [vmem:[%s2 + $0x310] sm:$0xff]
  %v138 = vld [vmem:[%s2 + $0x318] sm:$0xff]
  %v139 = vld [vmem:[%s2 + $0x320] sm:$0xff]
  %v140 = vld [vmem:[%s2 + $0x328] sm:$0xff]
  %v141 = vld [vmem:[%s2 + $0x330] sm:$0xff]
  %v142 = vld [vmem:[%s2 + $0x338] sm:$0xff]
  %v143 = vld [vmem:[%s2 + $0x340] sm:$0xff]
  %v144 = vld [vmem:[%s2 + $0x348] sm:$0xff]
  %v145 = vld [vmem:[%s2 + $0x350] sm:$0xff]
  %v146 = vld [vmem:[%s2 + $0x358] sm:$0xff]
  %v147 = vld [vmem:[%s2 + $0x360] sm:$0xff]
  %v148 = vld [vmem:[%s2 + $0x368] sm:$0xff]
  %v149 = vld [vmem:[%s2 + $0x370] sm:$0xff]
  %v150 = vld [vmem:[%s2 + $0x378] sm:$0xff]
  %v151 = vld [vmem:[%s2 + $0x380] sm:$0xff]
  %v152 = vld [vmem:[%s2 + $0x388] sm:$0xff]
  %v153 = vld [vmem:[%s2 + $0x390] sm:$0xff]
  %v154 = vld [vmem:[%s2 + $0x398] sm:$0xff]
  %v155 = vld [vmem:[%s2 + $0x3a0] sm:$0xff]
  %v156 = vld [vmem:[%s2 + $0x3a8] sm:$0xff]
  %v157 = vld [vmem:[%s2 + $0x3b0] sm:$0xff]
  %v158 = vld [vmem:[%s2 + $0x3b8] sm:$0xff]
  %v159 = vld [vmem:[%s2 + $0x3c0] sm:$0xff]
  %v160 = vld [vmem:[%s2 + $0x3c8] sm:$0xff]
  %v161 = vld [vmem:[%s2 + $0x3d0] sm:$0xff]
  %v162 = vld [vmem:[%s2 + $0x3d8] sm:$0xff]
  %v163 = vld [vmem:[%s2 + $0x3e0] sm:$0xff]
  %v164 = vld [vmem:[%s2 + $0x3e8] sm:$0xff]
  %v165 = vld [vmem:[%s2 + $0x3f0] sm:$0xff]
  %v166 = vld [vmem:[%s2 + $0x3f8] sm:$0xff]
  %v167 = vld [vmem:[%s3] sm:$0x1]
  %v169 = vlaneseq
  %v170 = vshrl.u32 %v169, 7
  %v171 = vsub.s32 0, %v170
  %v172 = vrot.slane %v167, %v171
  %v176 = vcombine.high %v37, %v37
  %v178 = vunpack.c.l.s4 1983009808
  %v179 = vunpack.c.0.s8 %v178
  %v180 = vlaneseq
  %v181 = vshrl.u32 %v180, 7
  %v182 = vsub.s32 %v179, %v181
  %v183 = vrot.slane %v37, %v182
  %v185 = vunpack.c.l.s4 1983009808
  %v186 = vunpack.c.0.s8 %v185
  %v187 = vlaneseq
  %v188 = vshrl.u32 %v187, 7
  %v189 = vsub.s32 %v186, %v188
  %v190 = vrot.slane %v176, %v189
  %v191 = vcombine.high %v183, %v183
  %v192 = vcombine.high %v190, %v190
  %v193 = vcombine.high %v38, %v38
  %v195 = vunpack.c.l.s4 1983009808
  %v196 = vunpack.c.0.s8 %v195
  %v197 = vlaneseq
  %v198 = vshrl.u32 %v197, 7
  %v199 = vsub.s32 %v196, %v198
  %v200 = vrot.slane %v38, %v199
  %v202 = vunpack.c.l.s4 1983009808
  %v203 = vunpack.c.0.s8 %v202
  %v204 = vlaneseq
  %v205 = vshrl.u32 %v204, 7
  %v206 = vsub.s32 %v203, %v205
  %v207 = vrot.slane %v193, %v206
  %v208 = vcombine.high %v200, %v200
  %v209 = vcombine.high %v207, %v207
  %218 = vmatprep.subr.mxu0 0.0
  %219 = vmatpush1.msra.mxu0 %v54
  %220 = vmatprep.subr.mxu0 0.0
  %221 = vmatpush1.msra.mxu0 %v53
  %222 = vmatprep.subr.mxu0 0.0
  %223 = vmatpush1.msra.mxu0 %v52
  %224 = vmatprep.subr.mxu0 0.0
  %225 = vmatpush1.msra.mxu0 %v51
  %226 = vmatprep.subr.mxu0 0.0
  %227 = vmatpush1.msra.mxu0 %v50
  %228 = vmatprep.subr.mxu0 0.0
  %229 = vmatpush1.msra.mxu0 %v49
  %230 = vmatprep.subr.mxu0 0.0
  %231 = vmatpush1.msra.mxu0 %v48
  %232 = vmatprep.subr.mxu0 0.0
  %233 = vmatpush1.msra.mxu0 %v47
  %234 = vmatprep.subr.mxu0 0.0
  %235 = vmatpush1.msra.mxu0 %v46
  %236 = vmatprep.subr.mxu0 0.0
  %237 = vmatpush1.msra.mxu0 %v45
  %238 = vmatprep.subr.mxu0 0.0
  %239 = vmatpush1.msra.mxu0 %v44
  %240 = vmatprep.subr.mxu0 0.0
  %241 = vmatpush1.msra.mxu0 %v43
  %242 = vmatprep.subr.mxu0 0.0
  %243 = vmatpush1.msra.mxu0 %v42
  %244 = vmatprep.subr.mxu0 0.0
  %245 = vmatpush1.msra.mxu0 %v41
  %246 = vmatprep.subr.mxu0 0.0
  %247 = vmatpush1.msra.mxu0 %v40
  %248 = vmatprep.subr.mxu0 0.0
  %249 = vmatpush1.msra.mxu0 %v39
  %250 = vmatprep.subr.mxu0 0.0
  %251 = vmatpush2.msra.mxu0 %v70
  %252 = vmatprep.subr.mxu0 0.0
  %253 = vmatpush2.msra.mxu0 %v69
  %254 = vmatprep.subr.mxu0 0.0
  %255 = vmatpush2.msra.mxu0 %v68
  %256 = vmatprep.subr.mxu0 0.0
  %257 = vmatpush2.msra.mxu0 %v67
  %258 = vmatprep.subr.mxu0 0.0
  %259 = vmatpush2.msra.mxu0 %v66
  %260 = vmatprep.subr.mxu0 0.0
  %261 = vmatpush2.msra.mxu0 %v65
  %262 = vmatprep.subr.mxu0 0.0
  %263 = vmatpush2.msra.mxu0 %v64
  %264 = vmatprep.subr.mxu0 0.0
  %265 = vmatpush2.msra.mxu0 %v63
  %266 = vmatprep.subr.mxu0 0.0
  %267 = vmatpush2.msra.mxu0 %v62
  %268 = vmatprep.subr.mxu0 0.0
  %269 = vmatpush2.msra.mxu0 %v61
  %270 = vmatprep.subr.mxu0 0.0
  %271 = vmatpush2.msra.mxu0 %v60
  %272 = vmatprep.subr.mxu0 0.0
  %273 = vmatpush2.msra.mxu0 %v59
  %274 = vmatprep.subr.mxu0 0.0
  %275 = vmatpush2.msra.mxu0 %v58
  %276 = vmatprep.subr.mxu0 0.0
  %277 = vmatpush2.msra.mxu0 %v57
  %278 = vmatprep.subr.mxu0 0.0
  %279 = vmatpush2.msra.mxu0 %v56
  %280 = vmatprep.subr.mxu0 0.0
  %281 = vmatpush2.msra.mxu0 %v55
  %282 = vmatprep.mubr.f32.mxu0 %v191
  %283 = vmatmul.mubr.f32.gmra.mxu0 %v183
  %v284 = vpop.f32.mrf.mxu0
  %v285 = vadd.f32 %v172, %v284
  %v286 = vpop.f32.mrf.mxu0
  %287 = vdwg.mxu0
  %288 = vmatprep.subr.mxu0 0.0
  %289 = vmatpush1.msra.mxu0 %v86
  %290 = vmatprep.subr.mxu0 0.0
  %291 = vmatpush1.msra.mxu0 %v85
  %292 = vmatprep.subr.mxu0 0.0
  %293 = vmatpush1.msra.mxu0 %v84
  %294 = vmatprep.subr.mxu0 0.0
  %295 = vmatpush1.msra.mxu0 %v83
  %296 = vmatprep.subr.mxu0 0.0
  %297 = vmatpush1.msra.mxu0 %v82
  %298 = vmatprep.subr.mxu0 0.0
  %299 = vmatpush1.msra.mxu0 %v81
  %300 = vmatprep.subr.mxu0 0.0
  %301 = vmatpush1.msra.mxu0 %v80
  %302 = vmatprep.subr.mxu0 0.0
  %303 = vmatpush1.msra.mxu0 %v79
  %304 = vmatprep.subr.mxu0 0.0
  %305 = vmatpush1.msra.mxu0 %v78
  %306 = vmatprep.subr.mxu0 0.0
  %307 = vmatpush1.msra.mxu0 %v77
  %308 = vmatprep.subr.mxu0 0.0
  %309 = vmatpush1.msra.mxu0 %v76
  %310 = vmatprep.subr.mxu0 0.0
  %311 = vmatpush1.msra.mxu0 %v75
  %312 = vmatprep.subr.mxu0 0.0
  %313 = vmatpush1.msra.mxu0 %v74
  %314 = vmatprep.subr.mxu0 0.0
  %315 = vmatpush1.msra.mxu0 %v73
  %316 = vmatprep.subr.mxu0 0.0
  %317 = vmatpush1.msra.mxu0 %v72
  %318 = vmatprep.subr.mxu0 0.0
  %319 = vmatpush1.msra.mxu0 %v71
  %320 = vmatprep.subr.mxu0 0.0
  %321 = vmatpush2.msra.mxu0 %v102
  %322 = vmatprep.subr.mxu0 0.0
  %323 = vmatpush2.msra.mxu0 %v101
  %324 = vmatprep.subr.mxu0 0.0
  %325 = vmatpush2.msra.mxu0 %v100
  %326 = vmatprep.subr.mxu0 0.0
  %327 = vmatpush2.msra.mxu0 %v99
  %328 = vmatprep.subr.mxu0 0.0
  %329 = vmatpush2.msra.mxu0 %v98
  %330 = vmatprep.subr.mxu0 0.0
  %331 = vmatpush2.msra.mxu0 %v97
  %332 = vmatprep.subr.mxu0 0.0
  %333 = vmatpush2.msra.mxu0 %v96
  %334 = vmatprep.subr.mxu0 0.0
  %335 = vmatpush2.msra.mxu0 %v95
  %336 = vmatprep.subr.mxu0 0.0
  %337 = vmatpush2.msra.mxu0 %v94
  %338 = vmatprep.subr.mxu0 0.0
  %339 = vmatpush2.msra.mxu0 %v93
  %340 = vmatprep.subr.mxu0 0.0
  %341 = vmatpush2.msra.mxu0 %v92
  %342 = vmatprep.subr.mxu0 0.0
  %343 = vmatpush2.msra.mxu0 %v91
  %344 = vmatprep.subr.mxu0 0.0
  %345 = vmatpush2.msra.mxu0 %v90
  %346 = vmatprep.subr.mxu0 0.0
  %347 = vmatpush2.msra.mxu0 %v89
  %348 = vmatprep.subr.mxu0 0.0
  %349 = vmatpush2.msra.mxu0 %v88
  %350 = vmatprep.subr.mxu0 0.0
  %351 = vmatpush2.msra.mxu0 %v87
  %352 = vmatprep.mubr.f32.mxu0 %v192
  %353 = vmatmul.mubr.f32.gmra.mxu0 %v190
  %v354 = vpop.f32.mrf.mxu0
  %v355 = vadd.f32 %v285, %v354
  %v356 = vpop.f32.mrf.mxu0
  %357 = vdwg.mxu0
  %358 = vmatprep.subr.mxu0 0.0
  %359 = vmatpush1.msra.mxu0 %v118
  %360 = vmatprep.subr.mxu0 0.0
  %361 = vmatpush1.msra.mxu0 %v117
  %362 = vmatprep.subr.mxu0 0.0
  %363 = vmatpush1.msra.mxu0 %v116
  %364 = vmatprep.subr.mxu0 0.0
  %365 = vmatpush1.msra.mxu0 %v115
  %366 = vmatprep.subr.mxu0 0.0
  %367 = vmatpush1.msra.mxu0 %v114
  %368 = vmatprep.subr.mxu0 0.0
  %369 = vmatpush1.msra.mxu0 %v113
  %370 = vmatprep.subr.mxu0 0.0
  %371 = vmatpush1.msra.mxu0 %v112
  %372 = vmatprep.subr.mxu0 0.0
  %373 = vmatpush1.msra.mxu0 %v111
  %374 = vmatprep.subr.mxu0 0.0
  %375 = vmatpush1.msra.mxu0 %v110
  %376 = vmatprep.subr.mxu0 0.0
  %377 = vmatpush1.msra.mxu0 %v109
  %378 = vmatprep.subr.mxu0 0.0
  %379 = vmatpush1.msra.mxu0 %v108
  %380 = vmatprep.subr.mxu0 0.0
  %381 = vmatpush1.msra.mxu0 %v107
  %382 = vmatprep.subr.mxu0 0.0
  %383 = vmatpush1.msra.mxu0 %v106
  %384 = vmatprep.subr.mxu0 0.0
  %385 = vmatpush1.msra.mxu0 %v105
  %386 = vmatprep.subr.mxu0 0.0
  %387 = vmatpush1.msra.mxu0 %v104
  %388 = vmatprep.subr.mxu0 0.0
  %389 = vmatpush1.msra.mxu0 %v103
  %390 = vmatprep.subr.mxu0 0.0
  %391 = vmatpush2.msra.mxu0 %v134
  %392 = vmatprep.subr.mxu0 0.0
  %393 = vmatpush2.msra.mxu0 %v133
  %394 = vmatprep.subr.mxu0 0.0
  %395 = vmatpush2.msra.mxu0 %v132
  %396 = vmatprep.subr.mxu0 0.0
  %397 = vmatpush2.msra.mxu0 %v131
  %398 = vmatprep.subr.mxu0 0.0
  %399 = vmatpush2.msra.mxu0 %v130
  %400 = vmatprep.subr.mxu0 0.0
  %401 = vmatpush2.msra.mxu0 %v129
  %402 = vmatprep.subr.mxu0 0.0
  %403 = vmatpush2.msra.mxu0 %v128
  %404 = vmatprep.subr.mxu0 0.0
  %405 = vmatpush2.msra.mxu0 %v127
  %406 = vmatprep.subr.mxu0 0.0
  %407 = vmatpush2.msra.mxu0 %v126
  %408 = vmatprep.subr.mxu0 0.0
  %409 = vmatpush2.msra.mxu0 %v125
  %410 = vmatprep.subr.mxu0 0.0
  %411 = vmatpush2.msra.mxu0 %v124
  %412 = vmatprep.subr.mxu0 0.0
  %413 = vmatpush2.msra.mxu0 %v123
  %414 = vmatprep.subr.mxu0 0.0
  %415 = vmatpush2.msra.mxu0 %v122
  %416 = vmatprep.subr.mxu0 0.0
  %417 = vmatpush2.msra.mxu0 %v121
  %418 = vmatprep.subr.mxu0 0.0
  %419 = vmatpush2.msra.mxu0 %v120
  %420 = vmatprep.subr.mxu0 0.0
  %421 = vmatpush2.msra.mxu0 %v119
  %422 = vmatprep.mubr.f32.mxu0 %v208
  %423 = vmatmul.mubr.f32.gmra.mxu0 %v200
  %v424 = vpop.f32.mrf.mxu0
  %v425 = vadd.f32 %v355, %v424
  %v426 = vpop.f32.mrf.mxu0
  %427 = vdwg.mxu0
  %428 = vmatprep.subr.mxu0 0.0
  %429 = vmatpush1.msra.mxu0 %v150
  %430 = vmatprep.subr.mxu0 0.0
  %431 = vmatpush1.msra.mxu0 %v149
  %432 = vmatprep.subr.mxu0 0.0
  %433 = vmatpush1.msra.mxu0 %v148
  %434 = vmatprep.subr.mxu0 0.0
  %435 = vmatpush1.msra.mxu0 %v147
  %436 = vmatprep.subr.mxu0 0.0
  %437 = vmatpush1.msra.mxu0 %v146
  %438 = vmatprep.subr.mxu0 0.0
  %439 = vmatpush1.msra.mxu0 %v145
  %440 = vmatprep.subr.mxu0 0.0
  %441 = vmatpush1.msra.mxu0 %v144
  %442 = vmatprep.subr.mxu0 0.0
  %443 = vmatpush1.msra.mxu0 %v143
  %444 = vmatprep.subr.mxu0 0.0
  %445 = vmatpush1.msra.mxu0 %v142
  %446 = vmatprep.subr.mxu0 0.0
  %447 = vmatpush1.msra.mxu0 %v141
  %448 = vmatprep.subr.mxu0 0.0
  %449 = vmatpush1.msra.mxu0 %v140
  %450 = vmatprep.subr.mxu0 0.0
  %451 = vmatpush1.msra.mxu0 %v139
  %452 = vmatprep.subr.mxu0 0.0
  %453 = vmatpush1.msra.mxu0 %v138
  %454 = vmatprep.subr.mxu0 0.0
  %455 = vmatpush1.msra.mxu0 %v137
  %456 = vmatprep.subr.mxu0 0.0
  %457 = vmatpush1.msra.mxu0 %v136
  %458 = vmatprep.subr.mxu0 0.0
  %459 = vmatpush1.msra.mxu0 %v135
  %460 = vmatprep.subr.mxu0 0.0
  %461 = vmatpush2.msra.mxu0 %v166
  %462 = vmatprep.subr.mxu0 0.0
  %463 = vmatpush2.msra.mxu0 %v165
  %464 = vmatprep.subr.mxu0 0.0
  %465 = vmatpush2.msra.mxu0 %v164
  %466 = vmatprep.subr.mxu0 0.0
  %467 = vmatpush2.msra.mxu0 %v163
  %468 = vmatprep.subr.mxu0 0.0
  %469 = vmatpush2.msra.mxu0 %v162
  %470 = vmatprep.subr.mxu0 0.0
  %471 = vmatpush2.msra.mxu0 %v161
  %472 = vmatprep.subr.mxu0 0.0
  %473 = vmatpush2.msra.mxu0 %v160
  %474 = vmatprep.subr.mxu0 0.0
  %475 = vmatpush2.msra.mxu0 %v159
  %476 = vmatprep.subr.mxu0 0.0
  %477 = vmatpush2.msra.mxu0 %v158
  %478 = vmatprep.subr.mxu0 0.0
  %479 = vmatpush2.msra.mxu0 %v157
  %480 = vmatprep.subr.mxu0 0.0
  %481 = vmatpush2.msra.mxu0 %v156
  %482 = vmatprep.subr.mxu0 0.0
  %483 = vmatpush2.msra.mxu0 %v155
  %484 = vmatprep.subr.mxu0 0.0
  %485 = vmatpush2.msra.mxu0 %v154
  %486 = vmatprep.subr.mxu0 0.0
  %487 = vmatpush2.msra.mxu0 %v153
  %488 = vmatprep.subr.mxu0 0.0
  %489 = vmatpush2.msra.mxu0 %v152
  %490 = vmatprep.subr.mxu0 0.0
  %491 = vmatpush2.msra.mxu0 %v151
  %492 = vmatprep.mubr.f32.mxu0 %v209
  %493 = vmatmul.mubr.f32.gmra.mxu0 %v207
  %v494 = vpop.f32.mrf.mxu0
  %v495 = vadd.f32 %v425, %v494
  %v496 = vpop.f32.mrf.mxu0
  %497 = vdwg.mxu0
  %v498 = vld [vmem:[%s1] sm:$0x3f]
  %v499 = vld [vmem:[%s1 + $0x8] sm:$0x3f]
  %v500 = vld [vmem:[%s4] sm:$0xff]
  %v501 = vld [vmem:[%s4 + $0x8] sm:$0xff]
  %v502 = vld [vmem:[%s4 + $0x10] sm:$0xff]
  %v503 = vld [vmem:[%s4 + $0x18] sm:$0xff]
  %v504 = vld [vmem:[%s4 + $0x20] sm:$0xff]
  %v505 = vld [vmem:[%s4 + $0x28] sm:$0xff]
  %v506 = vld [vmem:[%s4 + $0x30] sm:$0xff]
  %v507 = vld [vmem:[%s4 + $0x38] sm:$0xff]
  %v508 = vld [vmem:[%s4 + $0x40] sm:$0xff]
  %v509 = vld [vmem:[%s4 + $0x48] sm:$0xff]
  %v510 = vld [vmem:[%s4 + $0x50] sm:$0xff]
  %v511 = vld [vmem:[%s4 + $0x58] sm:$0xff]
  %v512 = vld [vmem:[%s4 + $0x60] sm:$0xff]
  %v513 = vld [vmem:[%s4 + $0x68] sm:$0xff]
  %v514 = vld [vmem:[%s4 + $0x70] sm:$0xff]
  %v515 = vld [vmem:[%s4 + $0x78] sm:$0xff]
  %v516 = vld [vmem:[%s4 + $0x80] sm:$0xff]
  %v517 = vld [vmem:[%s4 + $0x88] sm:$0xff]
  %v518 = vld [vmem:[%s4 + $0x90] sm:$0xff]
  %v519 = vld [vmem:[%s4 + $0x98] sm:$0xff]
  %v520 = vld [vmem:[%s4 + $0xa0] sm:$0xff]
  %v521 = vld [vmem:[%s4 + $0xa8] sm:$0xff]
  %v522 = vld [vmem:[%s4 + $0xb0] sm:$0xff]
  %v523 = vld [vmem:[%s4 + $0xb8] sm:$0xff]
  %v524 = vld [vmem:[%s4 + $0xc0] sm:$0xff]
  %v525 = vld [vmem:[%s4 + $0xc8] sm:$0xff]
  %v526 = vld [vmem:[%s4 + $0xd0] sm:$0xff]
  %v527 = vld [vmem:[%s4 + $0xd8] sm:$0xff]
  %v528 = vld [vmem:[%s4 + $0xe0] sm:$0xff]
  %v529 = vld [vmem:[%s4 + $0xe8] sm:$0xff]
  %v530 = vld [vmem:[%s4 + $0xf0] sm:$0xff]
  %v531 = vld [vmem:[%s4 + $0xf8] sm:$0xff]
  %v532 = vld [vmem:[%s5] sm:$0x1]
  %v534 = vlaneseq
  %v535 = vshrl.u32 %v534, 7
  %v536 = vsub.s32 0, %v535
  %v537 = vrot.slane %v532, %v536
  %539 = vmatprep.subr.mxu0 0.0
  %540 = vmatpush1.msra.mxu0 %v515
  %541 = vmatprep.subr.mxu0 0.0
  %542 = vmatpush1.msra.mxu0 %v514
  %543 = vmatprep.subr.mxu0 0.0
  %544 = vmatpush1.msra.mxu0 %v513
  %545 = vmatprep.subr.mxu0 0.0
  %546 = vmatpush1.msra.mxu0 %v512
  %547 = vmatprep.subr.mxu0 0.0
  %548 = vmatpush1.msra.mxu0 %v511
  %549 = vmatprep.subr.mxu0 0.0
  %550 = vmatpush1.msra.mxu0 %v510
  %551 = vmatprep.subr.mxu0 0.0
  %552 = vmatpush1.msra.mxu0 %v509
  %553 = vmatprep.subr.mxu0 0.0
  %554 = vmatpush1.msra.mxu0 %v508
  %555 = vmatprep.subr.mxu0 0.0
  %556 = vmatpush1.msra.mxu0 %v507
  %557 = vmatprep.subr.mxu0 0.0
  %558 = vmatpush1.msra.mxu0 %v506
  %559 = vmatprep.subr.mxu0 0.0
  %560 = vmatpush1.msra.mxu0 %v505
  %561 = vmatprep.subr.mxu0 0.0
  %562 = vmatpush1.msra.mxu0 %v504
  %563 = vmatprep.subr.mxu0 0.0
  %564 = vmatpush1.msra.mxu0 %v503
  %565 = vmatprep.subr.mxu0 0.0
  %566 = vmatpush1.msra.mxu0 %v502
  %567 = vmatprep.subr.mxu0 0.0
  %568 = vmatpush1.msra.mxu0 %v501
  %569 = vmatprep.subr.mxu0 0.0
  %570 = vmatpush1.msra.mxu0 %v500
  %571 = vmatprep.subr.mxu0 0.0
  %572 = vmatpush2.msra.mxu0 %v531
  %573 = vmatprep.subr.mxu0 0.0
  %574 = vmatpush2.msra.mxu0 %v530
  %575 = vmatprep.subr.mxu0 0.0
  %576 = vmatpush2.msra.mxu0 %v529
  %577 = vmatprep.subr.mxu0 0.0
  %578 = vmatpush2.msra.mxu0 %v528
  %579 = vmatprep.subr.mxu0 0.0
  %580 = vmatpush2.msra.mxu0 %v527
  %581 = vmatprep.subr.mxu0 0.0
  %582 = vmatpush2.msra.mxu0 %v526
  %583 = vmatprep.subr.mxu0 0.0
  %584 = vmatpush2.msra.mxu0 %v525
  %585 = vmatprep.subr.mxu0 0.0
  %586 = vmatpush2.msra.mxu0 %v524
  %587 = vmatprep.subr.mxu0 0.0
  %588 = vmatpush2.msra.mxu0 %v523
  %589 = vmatprep.subr.mxu0 0.0
  %590 = vmatpush2.msra.mxu0 %v522
  %591 = vmatprep.subr.mxu0 0.0
  %592 = vmatpush2.msra.mxu0 %v521
  %593 = vmatprep.subr.mxu0 0.0
  %594 = vmatpush2.msra.mxu0 %v520
  %595 = vmatprep.subr.mxu0 0.0
  %596 = vmatpush2.msra.mxu0 %v519
  %597 = vmatprep.subr.mxu0 0.0
  %598 = vmatpush2.msra.mxu0 %v518
  %599 = vmatprep.subr.mxu0 0.0
  %600 = vmatpush2.msra.mxu0 %v517
  %601 = vmatprep.subr.mxu0 0.0
  %602 = vmatpush2.msra.mxu0 %v516
  %603 = vmatprep.mubr.f32.mxu0 %v499
  %604 = vmatmul.mubr.f32.gmra.mxu0 %v498
  %v605 = vpop.f32.mrf.mxu0
  %v606 = vadd.f32 %v537, %v605
  %v607 = vpop.f32.mrf.mxu0
  %608 = vdwg.mxu0
  %v609 = vld [vmem:[%s6] sm:$0xff]
  %v610 = vld [vmem:[%s6 + $0x8] sm:$0xff]
  %v611 = vld [vmem:[%s6 + $0x10] sm:$0xff]
  %v612 = vld [vmem:[%s6 + $0x18] sm:$0xff]
  %vm613 = vcmask 261120
  %v615 = vsel %vm613, %v606, 0
  %617 = vmatprep.subr.mxu0 0.0
  %618 = vmatpush1.msra.mxu0 0.0
  %619 = vmatprep.subr.mxu0 0.0
  %620 = vmatpush1.msra.mxu0 0.0
  %621 = vmatprep.subr.mxu0 0.0
  %622 = vmatpush1.msra.mxu0 0.0
  %623 = vmatprep.subr.mxu0 0.0
  %624 = vmatpush1.msra.mxu0 0.0
  %625 = vmatprep.subr.mxu0 0.0
  %626 = vmatpush1.msra.mxu0 0.0
  %627 = vmatprep.subr.mxu0 0.0
  %628 = vmatpush1.msra.mxu0 0.0
  %629 = vmatprep.subr.mxu0 0.0
  %630 = vmatpush1.msra.mxu0 0.0
  %631 = vmatprep.subr.mxu0 0.0
  %632 = vmatpush1.msra.mxu0 0.0
  %633 = vmatprep.subr.mxu0 0.0
  %634 = vmatpush1.msra.mxu0 0.0
  %635 = vmatprep.subr.mxu0 0.0
  %636 = vmatpush1.msra.mxu0 0.0
  %637 = vmatprep.subr.mxu0 0.0
  %638 = vmatpush1.msra.mxu0 0.0
  %639 = vmatprep.subr.mxu0 0.0
  %640 = vmatpush1.msra.mxu0 0.0
  %641 = vmatprep.subr.mxu0 0.0
  %642 = vmatpush1.msra.mxu0 %v612
  %643 = vmatprep.subr.mxu0 0.0
  %644 = vmatpush1.msra.mxu0 %v611
  %645 = vmatprep.subr.mxu0 0.0
  %646 = vmatpush1.msra.mxu0 %v610
  %647 = vmatprep.subr.mxu0 0.0
  %648 = vmatpush1.msra.mxu0 %v609
  %649 = vmatprep.subr.mxu0 0.0
  %650 = vmatpush2.msra.mxu0 0.0
  %651 = vmatprep.subr.mxu0 0.0
  %652 = vmatpush2.msra.mxu0 0.0
  %653 = vmatprep.subr.mxu0 0.0
  %654 = vmatpush2.msra.mxu0 0.0
  %655 = vmatprep.subr.mxu0 0.0
  %656 = vmatpush2.msra.mxu0 0.0
  %657 = vmatprep.subr.mxu0 0.0
  %658 = vmatpush2.msra.mxu0 0.0
  %659 = vmatprep.subr.mxu0 0.0
  %660 = vmatpush2.msra.mxu0 0.0
  %661 = vmatprep.subr.mxu0 0.0
  %662 = vmatpush2.msra.mxu0 0.0
  %663 = vmatprep.subr.mxu0 0.0
  %664 = vmatpush2.msra.mxu0 0.0
  %665 = vmatprep.subr.mxu0 0.0
  %666 = vmatpush2.msra.mxu0 0.0
  %667 = vmatprep.subr.mxu0 0.0
  %668 = vmatpush2.msra.mxu0 0.0
  %669 = vmatprep.subr.mxu0 0.0
  %670 = vmatpush2.msra.mxu0 0.0
  %671 = vmatprep.subr.mxu0 0.0
  %672 = vmatpush2.msra.mxu0 0.0
  %673 = vmatprep.subr.mxu0 0.0
  %674 = vmatpush2.msra.mxu0 0.0
  %675 = vmatprep.subr.mxu0 0.0
  %676 = vmatpush2.msra.mxu0 0.0
  %677 = vmatprep.subr.mxu0 0.0
  %678 = vmatpush2.msra.mxu0 0.0
  %679 = vmatprep.subr.mxu0 0.0
  %680 = vmatpush2.msra.mxu0 0.0
  %681 = vmatprep.mubr.f32.mxu0 0.0
  %682 = vmatmul.mubr.f32.gmra.mxu0 %v615
  %v683 = vpop.f32.mrf.mxu0
  %v684 = vadd.f32 0.0, %v683
  %v685 = vpop.f32.mrf.mxu0
  %686 = vdwg.mxu0
  %v688 = vrot.slane %v684, 2
  %v690 = vmax.f32 %v684, %v688
  %v691 = vrot.slane %v684, 4
  %v693 = vmax.f32 %v690, %v691
  %v694 = vsub.f32 %v684, %v693
  %v695 = vmul.f32 %v694, 1.442695
  %v696 = vpow.pop %v695
  %v698 = vrot.slane %v693, 6
  %v700 = vsub.f32 %v684, %v698
  %v701 = vmul.f32 %v700, 1.442695
  %v702 = vpow.pop %v701
  %v703 = vrot.slane %v693, 4
  %v705 = vsub.f32 %v684, %v703
  %v706 = vmul.f32 %v705, 1.442695
  %v707 = vpow.pop %v706
  %v709 = vrot.slane %v702, 2
  %v711 = vadd.f32 %v696, %v709
  %v713 = vrot.slane %v707, 4
  %v715 = vadd.f32 %v711, %v713
  %v716 = vrcp.pop %v715
  %v717 = vmul.f32 1.0, %v716
  %v718 = vmul.f32 %v696, %v717
  %720 = vset.pattern.permute.xlu0 0
  %721 = vperm.xlu0 %720, %v718
  %v722 = vpop.permute.xlu0 %721
  %v724 = vmul.f32 %v722, %v606
  %v726 = vrot.slane %v717, 6
  %v728 = vmul.f32 %v702, %v726
  %730 = vset.pattern.permute.xlu0 0
  %731 = vperm.xlu0 %730, %v728
  %v732 = vpop.permute.xlu0 %731
  %v734 = vmul.f32 %v732, %v606
  %v736 = vrot.slane %v734, 2
  %v738 = vadd.f32 %v724, %v736
  %v739 = vrot.slane %v717, 4
  %v741 = vmul.f32 %v707, %v739
  %743 = vset.pattern.permute.xlu0 0
  %744 = vperm.xlu0 %743, %v741
  %v745 = vpop.permute.xlu0 %744
  %v747 = vmul.f32 %v745, %v606
  %v749 = vrot.slane %v747, 4
  %v751 = vadd.f32 %v738, %v749
  %v752 = vadd.f32 %v495, %v751
  %v753 = vld [vmem:[%s7] sm:$0xff]
  %v754 = vld [vmem:[%s7 + $0x8] sm:$0xff]
  %v755 = vld [vmem:[%s7 + $0x10] sm:$0xff]
  %v756 = vld [vmem:[%s7 + $0x18] sm:$0xff]
  %v757 = vld [vmem:[#allocation2] sm:$0x1]
  %v759 = vlaneseq
  %v760 = vshrl.u32 %v759, 7
  %v761 = vsub.s32 0, %v760
  %v762 = vrot.slane %v757, %v761
  %v765 = vsel %vm613, %v752, 0
  %767 = vmatprep.subr.mxu0 0.0
  %768 = vmatpush1.msra.mxu0 0.0
  %769 = vmatprep.subr.mxu0 0.0
  %770 = vmatpush1.msra.mxu0 0.0
  %771 = vmatprep.subr.mxu0 0.0
  %772 = vmatpush1.msra.mxu0 0.0
  %773 = vmatprep.subr.mxu0 0.0
  %774 = vmatpush1.msra.mxu0 0.0
  %775 = vmatprep.subr.mxu0 0.0
  %776 = vmatpush1.msra.mxu0 0.0
  %777 = vmatprep.subr.mxu0 0.0
  %778 = vmatpush1.msra.mxu0 0.0
  %779 = vmatprep.subr.mxu0 0.0
  %780 = vmatpush1.msra.mxu0 0.0
  %781 = vmatprep.subr.mxu0 0.0
  %782 = vmatpush1.msra.mxu0 0.0
  %783 = vmatprep.subr.mxu0 0.0
  %784 = vmatpush1.msra.mxu0 0.0
  %785 = vmatprep.subr.mxu0 0.0
  %786 = vmatpush1.msra.mxu0 0.0
  %787 = vmatprep.subr.mxu0 0.0
  %788 = vmatpush1.msra.mxu0 0.0
  %789 = vmatprep.subr.mxu0 0.0
  %790 = vmatpush1.msra.mxu0 0.0
  %791 = vmatprep.subr.mxu0 0.0
  %792 = vmatpush1.msra.mxu0 %v756
  %793 = vmatprep.subr.mxu0 0.0
  %794 = vmatpush1.msra.mxu0 %v755
  %795 = vmatprep.subr.mxu0 0.0
  %796 = vmatpush1.msra.mxu0 %v754
  %797 = vmatprep.subr.mxu0 0.0
  %798 = vmatpush1.msra.mxu0 %v753
  %799 = vmatprep.subr.mxu0 0.0
  %800 = vmatpush2.msra.mxu0 0.0
  %801 = vmatprep.subr.mxu0 0.0
  %802 = vmatpush2.msra.mxu0 0.0
  %803 = vmatprep.subr.mxu0 0.0
  %804 = vmatpush2.msra.mxu0 0.0
  %805 = vmatprep.subr.mxu0 0.0
  %806 = vmatpush2.msra.mxu0 0.0
  %807 = vmatprep.subr.mxu0 0.0
  %808 = vmatpush2.msra.mxu0 0.0
  %809 = vmatprep.subr.mxu0 0.0
  %810 = vmatpush2.msra.mxu0 0.0
  %811 = vmatprep.subr.mxu0 0.0
  %812 = vmatpush2.msra.mxu0 0.0
  %813 = vmatprep.subr.mxu0 0.0
  %814 = vmatpush2.msra.mxu0 0.0
  %815 = vmatprep.subr.mxu0 0.0
  %816 = vmatpush2.msra.mxu0 0.0
  %817 = vmatprep.subr.mxu0 0.0
  %818 = vmatpush2.msra.mxu0 0.0
  %819 = vmatprep.subr.mxu0 0.0
  %820 = vmatpush2.msra.mxu0 0.0
  %821 = vmatprep.subr.mxu0 0.0
  %822 = vmatpush2.msra.mxu0 0.0
  %823 = vmatprep.subr.mxu0 0.0
  %824 = vmatpush2.msra.mxu0 0.0
  %825 = vmatprep.subr.mxu0 0.0
  %826 = vmatpush2.msra.mxu0 0.0
  %827 = vmatprep.subr.mxu0 0.0
  %828 = vmatpush2.msra.mxu0 0.0
  %829 = vmatprep.subr.mxu0 0.0
  %830 = vmatpush2.msra.mxu0 0.0
  %831 = vmatprep.mubr.f32.mxu0 0.0
  %832 = vmatmul.mubr.f32.gmra.mxu0 %v765
  %v833 = vpop.f32.mrf.mxu0
  %v834 = vadd.f32 %v762, %v833
  %v835 = vpop.f32.mrf.mxu0
  %836 = vdwg.mxu0
  %v837 = vsub.f32 %v693, %v684
  %v838 = vmul.f32 %v837, %v837
  %vm839 = vcmask 1024
  %v840 = vsel %vm839, %v838, 0.0
  %v841 = vrot.slane %v840, 4
  %v842 = vadd.f32 %v840, %v841
  %v843 = vrot.slane %v842, 2
  %v844 = vadd.f32 %v842, %v843
  %v845 = vrot.slane %v844, 1
  %v846 = vadd.f32 %v844, %v845
  %v847 = vadd.f32 %v846, 0.0
  %v848 = vsub.f32 %v693, %v688
  %v849 = vmul.f32 %v848, %v848
  %v850 = vsel %vm839, %v849, 0.0
  %v851 = vrot.slane %v850, 4
  %v852 = vadd.f32 %v850, %v851
  %v853 = vrot.slane %v852, 2
  %v854 = vadd.f32 %v852, %v853
  %v855 = vrot.slane %v854, 1
  %v856 = vadd.f32 %v854, %v855
  %v857 = vadd.f32 %v847, %v856
  %v858 = vsub.f32 %v693, %v691
  %v859 = vmul.f32 %v858, %v858
  %v860 = vsel %vm839, %v859, 0.0
  %v861 = vrot.slane %v860, 4
  %v862 = vadd.f32 %v860, %v861
  %v863 = vrot.slane %v862, 2
  %v864 = vadd.f32 %v862, %v863
  %v865 = vrot.slane %v864, 1
  %v866 = vadd.f32 %v864, %v865
  %v867 = vadd.f32 %v857, %v866
  %v868 = vmul.f32 %v867, 0.16666667
  %v869 = vld [vmem:[%s9] sm:$0x3]
  %v870 = vsel %vm839, %v834, -inf
  %v871 = vrot.slane %v870, 4
  %v872 = vmax.f32 %v870, %v871
  %v873 = vrot.slane %v872, 2
  %v874 = vmax.f32 %v872, %v873
  %v875 = vrot.slane %v874, 1
  %v876 = vmax.f32 %v874, %v875
  %v877 = vsub.f32 %v834, %v876
  %v878 = vmul.f32 %v877, 1.442695
  %v879 = vpow.pop %v878
  %v880 = vsel %vm839, %v879, 0.0
  %v881 = vrot.slane %v880, 4
  %v882 = vadd.f32 %v880, %v881
  %v883 = vrot.slane %v882, 2
  %v884 = vadd.f32 %v882, %v883
  %v885 = vrot.slane %v884, 1
  %v886 = vadd.f32 %v884, %v885
  %v887 = vlog2.pop %v886
  %v888 = vmul.f32 %v887, 0.6931472
  %v889 = vadd.f32 %v888, %v876
  %v890 = vsub.f32 %v889, %v834
  %v891 = vmul.f32 %v869, %v890
  %v892 = vsel %vm839, %v891, 0.0
  %v893 = vrot.slane %v892, 4
  %v894 = vadd.f32 %v892, %v893
  %v895 = vrot.slane %v894, 2
  %v896 = vadd.f32 %v894, %v895
  %v897 = vrot.slane %v896, 1
  %v898 = vadd.f32 %v896, %v897
  %v899 = vadd.f32 %v868, %v898
  %900 = vst [vmem:[%s10] sm:$0xff] 0.0
  %901 = vst.msk [vmem:[%s10] sm:$0x3] %vm839, %v834
  %902 = vrot.lane.b32.xlu0 %v693, 1
  %v903 = vpop.permute.xlu0 %902
  %vm905 = vcmask 9224
  %906 = vst.msk [vmem:[%s10] sm:$0x3] %vm905, %v903
  %907 = vrot.lane.b32.xlu0 %v684, 2
  %v908 = vpop.permute.xlu0 %907
  %vm910 = vcmask 17424
  %911 = vst.msk [vmem:[%s10] sm:$0x3] %vm910, %v908
  %912 = vrot.lane.b32.xlu0 %v684, 3
  %v913 = vpop.permute.xlu0 %912
  %vm915 = vcmask 27674
  %916 = vst.msk [vmem:[%s10 - $0x2] sm:$0xc] %vm915, %v913
  %917 = vrot.lane.b32.xlu0 %v684, 4
  %v918 = vpop.permute.xlu0 %917
  %vm920 = vcmask 37924
  %921 = vst.msk [vmem:[%s10 - $0x4] sm:$0x30] %vm920, %v918
  %923 = vrot.lane.b32.xlu0 %v899, 5
  %v924 = vpop.permute.xlu0 %923
  %vm926 = vcmask 41000
  %927 = vst.msk [vmem:[%s10] sm:$0x1] %vm926, %v924
  // Predicated region
  $region42: #{trainer_forward.1} parent=0 // pred_check
    _
  $region43: #{trainer_forward.1} parent=0 // pred_check_branch
    %929 = sbr.rel (0) target = $region45
  $region44: #{trainer_forward.1} parent=0 // pred_region
    _
  $region45: #{trainer_forward.1} parent=0 // pred_fallthru
    _
  // Predicated region
  $region46: #{trainer_forward.1} parent=0 // pred_check
    _
  $region47: #{trainer_forward.1} parent=0 // pred_check_branch
    %931 = sbr.rel (0) target = $region49
  $region48: #{trainer_forward.1} parent=0 // pred_region
    _
  $region49: #{trainer_forward.1} parent=0 // pred_fallthru
    _

</llo_original>
